<compile_context>
chip_gen: v7x
topology: tpu7x:2x2x1
jax: 0.10.0
libtpu: 0.0.40
codegen_flags: <defaults>
</compile_context>

<pallas_src>
import jax
import jax.numpy as jnp
from jax.experimental import pallas as pl
from jax.experimental.pallas import tpu as pltpu

HIDDEN = 128  # fixed by the module definition


def _round_up(n, m):
    return (n + m - 1) // m * m


def autoencoder_kernel(x_ref,
                       w1_ref, b1_ref,
                       w2_ref, b2_ref,
                       w3_ref, b3_ref,
                       w4_ref, b4_ref,
                       latent_ref, recon_ref):
    # ----- encoder -----
    x = x_ref[...]                                                   # bf16 [TB, Dp]
    h1 = jnp.dot(x, w1_ref[...],
                 preferred_element_type=jnp.float32) + b1_ref[...]   # f32 [TB, 128]
    h1 = jnp.maximum(h1, 0.0)                                        # ReLU
    # BatchNorm1d -> Identity (use_batch_norm=False); Dropout(0.0) -> identity
    z = jnp.dot(h1.astype(jnp.bfloat16), w2_ref[...],
                preferred_element_type=jnp.float32) + b2_ref[...]    # f32 [TB, Lp]
    z = jnp.maximum(z, 0.0)                                          # ReLU
    latent = pl.reciprocal(1.0 + jnp.exp(-z), approx=True)           # Sigmoid (EUP)
    latent_ref[...] = latent.astype(latent_ref.dtype)

    # ----- decoder -----
    h2 = jnp.dot(latent.astype(jnp.bfloat16), w3_ref[...],
                 preferred_element_type=jnp.float32) + b3_ref[...]   # f32 [TB, 128]
    h2 = jnp.maximum(h2, 0.0)                                        # ReLU
    r = jnp.dot(h2.astype(jnp.bfloat16), w4_ref[...],
                preferred_element_type=jnp.float32) + b4_ref[...]    # f32 [TB, Dp]
    recon = pl.reciprocal(1.0 + jnp.exp(-r), approx=True)            # Sigmoid (EUP)
    recon_ref[...] = recon.astype(recon_ref.dtype)


def autoencoder_forward(x, params, *, tb=256):
    """x: [B, input_dim] float32.  params: dict of [in,out] weights, [1,out] biases."""
    B, input_dim = x.shape
    hidden = params["w1"].shape[1]
    latent_dim = params["w2"].shape[1]
    assert hidden == HIDDEN

    # Lane-dense padded feature dims; batch padded to a multiple of the tile.
    Dp = _round_up(input_dim, 128)
    Lp = _round_up(latent_dim, 128)
    B8 = _round_up(B, 8)
    TB = min(_round_up(tb, 8), B8)
    Bp = _round_up(B8, TB)

    f32, bf16 = jnp.float32, jnp.bfloat16

    def pad2(a, rows, cols, dtype):
        r, c = a.shape
        return jnp.pad(a, ((0, rows - r), (0, cols - c))).astype(dtype)

    # Zero-padding rows/cols keeps the math exact (padded lanes contribute 0,
    # and padded output lanes are sliced off below).
    xp = pad2(x, Bp, Dp, bf16)
    w1 = pad2(params["w1"], Dp, HIDDEN, bf16); b1 = pad2(params["b1"], 1, HIDDEN, f32)
    w2 = pad2(params["w2"], HIDDEN, Lp, bf16); b2 = pad2(params["b2"], 1, Lp, f32)
    w3 = pad2(params["w3"], Lp, HIDDEN, bf16); b3 = pad2(params["b3"], 1, HIDDEN, f32)
    w4 = pad2(params["w4"], HIDDEN, Dp, bf16); b4 = pad2(params["b4"], 1, Dp, f32)

    grid = (Bp // TB,)

    def row_spec(shape):
        return pl.BlockSpec(shape, lambda i: (i, 0))

    def const_spec(shape):
        return pl.BlockSpec(shape, lambda i: (0, 0))

    w_elems = Dp * HIDDEN + HIDDEN * Lp + Lp * HIDDEN + HIDDEN * Dp
    cost = pl.CostEstimate(
        flops=2 * Bp * w_elems,
        transcendentals=Bp * (Lp + Dp),
        bytes_accessed=(2 * Bp * Dp                  # x (bf16)
                        + 2 * w_elems                # weights (bf16)
                        + 4 * (2 * HIDDEN + Lp + Dp)  # biases (f32)
                        + 4 * Bp * (Lp + Dp)))        # outputs (f32)

    latent_p, recon_p = pl.pallas_call(
        autoencoder_kernel,
        grid=grid,
        in_specs=[
            row_spec((TB, Dp)),                       # x tile
            const_spec((Dp, HIDDEN)), const_spec((1, HIDDEN)),   # w1, b1 (resident)
            const_spec((HIDDEN, Lp)), const_spec((1, Lp)),       # w2, b2
            const_spec((Lp, HIDDEN)), const_spec((1, HIDDEN)),   # w3, b3
            const_spec((HIDDEN, Dp)), const_spec((1, Dp)),       # w4, b4
        ],
        out_specs=(row_spec((TB, Lp)), row_spec((TB, Dp))),
        out_shape=(
            jax.ShapeDtypeStruct((Bp, Lp), jnp.float32),
            jax.ShapeDtypeStruct((Bp, Dp), jnp.float32),
        ),
        compiler_params=pltpu.CompilerParams(
            dimension_semantics=("parallel",),        # megacore sharding (v7x: 2 TCs)
            vmem_limit_bytes=32 * 1024 * 1024,        # safe on v5e/v6e/v7x
        ),
        cost_estimate=cost,
    )(xp, w1, b1, w2, b2, w3, b3, w4, b4)

    # Slice off batch / lane padding.
    return latent_p[:B, :latent_dim], recon_p[:B, :input_dim]


def init_params(key, input_dim, latent_dim, hidden=HIDDEN):
    """PyTorch-style uniform(+/- 1/sqrt(fan_in)) init; weights stored [in, out]."""
    keys = jax.random.split(key, 8)

    def linear(kw, kb, fan_in, fan_out):
        bound = 1.0 / jnp.sqrt(jnp.float32(fan_in))
        w = jax.random.uniform(kw, (fan_in, fan_out), jnp.float32, -bound, bound)
        b = jax.random.uniform(kb, (1, fan_out), jnp.float32, -bound, bound)
        return w, b

    w1, b1 = linear(keys[0], keys[1], input_dim, hidden)
    w2, b2 = linear(keys[2], keys[3], hidden, latent_dim)
    w3, b3 = linear(keys[4], keys[5], latent_dim, hidden)
    w4, b4 = linear(keys[6], keys[7], hidden, input_dim)
    return {"w1": w1, "b1": b1, "w2": w2, "b2": b2,
            "w3": w3, "b3": b3, "w4": w4, "b4": b4}


def reference_forward(x, p):
    """Pure-JAX f32 reference mirroring the PyTorch module semantics."""
    h1 = jax.nn.relu(x @ p["w1"] + p["b1"])
    latent = jax.nn.sigmoid(jax.nn.relu(h1 @ p["w2"] + p["b2"]))
    h2 = jax.nn.relu(latent @ p["w3"] + p["b3"])
    recon = jax.nn.sigmoid(h2 @ p["w4"] + p["b4"])
    return latent, recon


if __name__ == "__main__":
    key = jax.random.PRNGKey(0)
    k_x, k_p = jax.random.split(key)

    batch = 8
    input_dim = 64
    latent_dim = 32

    x = jax.random.uniform(k_x, (batch, input_dim), jnp.float32)
    params = init_params(k_p, input_dim, latent_dim)

    latent, recon = jax.jit(autoencoder_forward)(x, params)
    jax.block_until_ready((latent, recon))

    lat_ref, rec_ref = reference_forward(x, params)
    assert latent.shape == (batch, latent_dim)
    assert recon.shape == (batch, input_dim)
    # bf16 matmul operands + approx reciprocal -> relaxed tolerance vs f32 ref.
    assert jnp.allclose(latent, lat_ref, atol=2e-2, rtol=2e-2)
    assert jnp.allclose(recon, rec_ref, atol=2e-2, rtol=2e-2)

    print("KERNEL_OK")
</pallas_src>

<mosaic_0001>
module attributes {stable_mosaic.version = 11 : i64} {
  func.func @autoencoder_kernel(%arg0: i32, %arg1: memref<8x128xbf16, #tpu.memory_space<vmem>>, %arg2: memref<128x128xbf16, #tpu.memory_space<vmem>>, %arg3: memref<1x128xf32, #tpu.memory_space<vmem>>, %arg4: memref<128x128xbf16, #tpu.memory_space<vmem>>, %arg5: memref<1x128xf32, #tpu.memory_space<vmem>>, %arg6: memref<128x128xbf16, #tpu.memory_space<vmem>>, %arg7: memref<1x128xf32, #tpu.memory_space<vmem>>, %arg8: memref<128x128xbf16, #tpu.memory_space<vmem>>, %arg9: memref<1x128xf32, #tpu.memory_space<vmem>>, %arg10: memref<8x128xf32, #tpu.memory_space<vmem>>, %arg11: memref<8x128xf32, #tpu.memory_space<vmem>>) attributes {dimension_semantics = [#tpu.dimension_semantics<parallel>], iteration_bounds = array<i64: 1>, scalar_prefetch = 0 : i64, scratch_operands = 0 : i64, tpu.core_type = #tpu.core_type<tc>, window_params = [{transform_indices = @transform_0, window_bounds = array<i64: 8, 128>}, {pipeline_mode = #tpu.pipeline_mode<synchronous>, transform_indices = @transform_1, window_bounds = array<i64: 128, 128>}, {pipeline_mode = #tpu.pipeline_mode<synchronous>, transform_indices = @transform_2, window_bounds = array<i64: 1, 128>}, {pipeline_mode = #tpu.pipeline_mode<synchronous>, transform_indices = @transform_3, window_bounds = array<i64: 128, 128>}, {pipeline_mode = #tpu.pipeline_mode<synchronous>, transform_indices = @transform_4, window_bounds = array<i64: 1, 128>}, {pipeline_mode = #tpu.pipeline_mode<synchronous>, transform_indices = @transform_5, window_bounds = array<i64: 128, 128>}, {pipeline_mode = #tpu.pipeline_mode<synchronous>, transform_indices = @transform_6, window_bounds = array<i64: 1, 128>}, {pipeline_mode = #tpu.pipeline_mode<synchronous>, transform_indices = @transform_7, window_bounds = array<i64: 128, 128>}, {pipeline_mode = #tpu.pipeline_mode<synchronous>, transform_indices = @transform_8, window_bounds = array<i64: 1, 128>}, {transform_indices = @transform_9, window_bounds = array<i64: 8, 128>}, {transform_indices = @transform_10, window_bounds = array<i64: 8, 128>}]} {
    %c0 = arith.constant 0 : index
    %c0_0 = arith.constant 0 : index
    %0 = vector.load %arg1[%c0, %c0_0] : memref<8x128xbf16, #tpu.memory_space<vmem>>, vector<8x128xbf16>
    %c0_1 = arith.constant 0 : index
    %c0_2 = arith.constant 0 : index
    %1 = vector.load %arg2[%c0_1, %c0_2] : memref<128x128xbf16, #tpu.memory_space<vmem>>, vector<128x128xbf16>
    %cst = arith.constant dense<0.000000e+00> : vector<8x128xf32>
    %2 = tpu.matmul %0, %1, %cst {dimension_numbers = #tpu.dot_dimension_numbers<[1], [0], [0], [1], [0, 0, 1, 1], [], []>} : vector<8x128xbf16>, vector<128x128xbf16>, vector<8x128xf32> -> vector<8x128xf32>
    %c0_3 = arith.constant 0 : index
    %c0_4 = arith.constant 0 : index
    %3 = vector.load %arg3[%c0_3, %c0_4] : memref<1x128xf32, #tpu.memory_space<vmem>>, vector<1x128xf32>
    %4 = vector.broadcast %3 : vector<1x128xf32> to vector<8x128xf32>
    %5 = arith.addf %2, %4 : vector<8x128xf32>
    %cst_5 = arith.constant 0.000000e+00 : f32
    %6 = vector.broadcast %cst_5 : f32 to vector<8x128xf32>
    %7 = arith.maximumf %5, %6 : vector<8x128xf32>
    %8 = arith.truncf %7 : vector<8x128xf32> to vector<8x128xbf16>
    %c0_6 = arith.constant 0 : index
    %c0_7 = arith.constant 0 : index
    %9 = vector.load %arg4[%c0_6, %c0_7] : memref<128x128xbf16, #tpu.memory_space<vmem>>, vector<128x128xbf16>
    %cst_8 = arith.constant dense<0.000000e+00> : vector<8x128xf32>
    %10 = tpu.matmul %8, %9, %cst_8 {dimension_numbers = #tpu.dot_dimension_numbers<[1], [0], [0], [1], [0, 0, 1, 1], [], []>} : vector<8x128xbf16>, vector<128x128xbf16>, vector<8x128xf32> -> vector<8x128xf32>
    %c0_9 = arith.constant 0 : index
    %c0_10 = arith.constant 0 : index
    %11 = vector.load %arg5[%c0_9, %c0_10] : memref<1x128xf32, #tpu.memory_space<vmem>>, vector<1x128xf32>
    %12 = vector.broadcast %11 : vector<1x128xf32> to vector<8x128xf32>
    %13 = arith.addf %10, %12 : vector<8x128xf32>
    %cst_11 = arith.constant 0.000000e+00 : f32
    %14 = vector.broadcast %cst_11 : f32 to vector<8x128xf32>
    %15 = arith.maximumf %13, %14 : vector<8x128xf32>
    %cst_12 = arith.constant 0.000000e+00 : f32
    %16 = vector.broadcast %cst_12 : f32 to vector<8x128xf32>
    %17 = arith.subf %16, %15 : vector<8x128xf32>
    %18 = math.exp %17 : vector<8x128xf32>
    %cst_13 = arith.constant 1.000000e+00 : f32
    %19 = vector.broadcast %cst_13 : f32 to vector<8x128xf32>
    %20 = arith.addf %19, %18 : vector<8x128xf32>
    %21 = tpu.reciprocal %20 {approx = true} : vector<8x128xf32> -> vector<8x128xf32>
    %c0_14 = arith.constant 0 : index
    %c0_15 = arith.constant 0 : index
    %22 = vector.load %arg10[%c0_14, %c0_15] : memref<8x128xf32, #tpu.memory_space<vmem>>, vector<8x128xf32>
    tpu.vector_store %arg10[%c0_14, %c0_15], %21 {strides = array<i32>} : memref<8x128xf32, #tpu.memory_space<vmem>>, vector<8x128xf32>,
    %23 = arith.truncf %21 : vector<8x128xf32> to vector<8x128xbf16>
    %c0_16 = arith.constant 0 : index
    %c0_17 = arith.constant 0 : index
    %24 = vector.load %arg6[%c0_16, %c0_17] : memref<128x128xbf16, #tpu.memory_space<vmem>>, vector<128x128xbf16>
    %cst_18 = arith.constant dense<0.000000e+00> : vector<8x128xf32>
    %25 = tpu.matmul %23, %24, %cst_18 {dimension_numbers = #tpu.dot_dimension_numbers<[1], [0], [0], [1], [0, 0, 1, 1], [], []>} : vector<8x128xbf16>, vector<128x128xbf16>, vector<8x128xf32> -> vector<8x128xf32>
    %c0_19 = arith.constant 0 : index
    %c0_20 = arith.constant 0 : index
    %26 = vector.load %arg7[%c0_19, %c0_20] : memref<1x128xf32, #tpu.memory_space<vmem>>, vector<1x128xf32>
    %27 = vector.broadcast %26 : vector<1x128xf32> to vector<8x128xf32>
    %28 = arith.addf %25, %27 : vector<8x128xf32>
    %cst_21 = arith.constant 0.000000e+00 : f32
    %29 = vector.broadcast %cst_21 : f32 to vector<8x128xf32>
    %30 = arith.maximumf %28, %29 : vector<8x128xf32>
    %31 = arith.truncf %30 : vector<8x128xf32> to vector<8x128xbf16>
    %c0_22 = arith.constant 0 : index
    %c0_23 = arith.constant 0 : index
    %32 = vector.load %arg8[%c0_22, %c0_23] : memref<128x128xbf16, #tpu.memory_space<vmem>>, vector<128x128xbf16>
    %cst_24 = arith.constant dense<0.000000e+00> : vector<8x128xf32>
    %33 = tpu.matmul %31, %32, %cst_24 {dimension_numbers = #tpu.dot_dimension_numbers<[1], [0], [0], [1], [0, 0, 1, 1], [], []>} : vector<8x128xbf16>, vector<128x128xbf16>, vector<8x128xf32> -> vector<8x128xf32>
    %c0_25 = arith.constant 0 : index
    %c0_26 = arith.constant 0 : index
    %34 = vector.load %arg9[%c0_25, %c0_26] : memref<1x128xf32, #tpu.memory_space<vmem>>, vector<1x128xf32>
    %35 = vector.broadcast %34 : vector<1x128xf32> to vector<8x128xf32>
    %36 = arith.addf %33, %35 : vector<8x128xf32>
    %cst_27 = arith.constant 0.000000e+00 : f32
    %37 = vector.broadcast %cst_27 : f32 to vector<8x128xf32>
    %38 = arith.subf %37, %36 : vector<8x128xf32>
    %39 = math.exp %38 : vector<8x128xf32>
    %cst_28 = arith.constant 1.000000e+00 : f32
    %40 = vector.broadcast %cst_28 : f32 to vector<8x128xf32>
    %41 = arith.addf %40, %39 : vector<8x128xf32>
    %42 = tpu.reciprocal %41 {approx = true} : vector<8x128xf32> -> vector<8x128xf32>
    %c0_29 = arith.constant 0 : index
    %c0_30 = arith.constant 0 : index
    %43 = vector.load %arg11[%c0_29, %c0_30] : memref<8x128xf32, #tpu.memory_space<vmem>>, vector<8x128xf32>
    tpu.vector_store %arg11[%c0_29, %c0_30], %42 {strides = array<i32>} : memref<8x128xf32, #tpu.memory_space<vmem>>, vector<8x128xf32>,
    return
  }
  func.func @transform_0(%arg0: i32) -> (i32, i32) {
    %c0_i32 = arith.constant 0 : i32
    %c0_i32_0 = arith.constant 0 : i32
    return %arg0, %c0_i32 : i32, i32
  }
  func.func @transform_1(%arg0: i32) -> (i32, i32) {
    %c0_i32 = arith.constant 0 : i32
    %c0_i32_0 = arith.constant 0 : i32
    %c0_i32_1 = arith.constant 0 : i32
    return %c0_i32, %c0_i32_0 : i32, i32
  }
  func.func @transform_2(%arg0: i32) -> (i32, i32) {
    %c0_i32 = arith.constant 0 : i32
    %c0_i32_0 = arith.constant 0 : i32
    %c0_i32_1 = arith.constant 0 : i32
    return %c0_i32, %c0_i32_0 : i32, i32
  }
  func.func @transform_3(%arg0: i32) -> (i32, i32) {
    %c0_i32 = arith.constant 0 : i32
    %c0_i32_0 = arith.constant 0 : i32
    %c0_i32_1 = arith.constant 0 : i32
    return %c0_i32, %c0_i32_0 : i32, i32
  }
  func.func @transform_4(%arg0: i32) -> (i32, i32) {
    %c0_i32 = arith.constant 0 : i32
    %c0_i32_0 = arith.constant 0 : i32
    %c0_i32_1 = arith.constant 0 : i32
    return %c0_i32, %c0_i32_0 : i32, i32
  }
  func.func @transform_5(%arg0: i32) -> (i32, i32) {
    %c0_i32 = arith.constant 0 : i32
    %c0_i32_0 = arith.constant 0 : i32
    %c0_i32_1 = arith.constant 0 : i32
    return %c0_i32, %c0_i32_0 : i32, i32
  }
  func.func @transform_6(%arg0: i32) -> (i32, i32) {
    %c0_i32 = arith.constant 0 : i32
    %c0_i32_0 = arith.constant 0 : i32
    %c0_i32_1 = arith.constant 0 : i32
    return %c0_i32, %c0_i32_0 : i32, i32
  }
  func.func @transform_7(%arg0: i32) -> (i32, i32) {
    %c0_i32 = arith.constant 0 : i32
    %c0_i32_0 = arith.constant 0 : i32
    %c0_i32_1 = arith.constant 0 : i32
    return %c0_i32, %c0_i32_0 : i32, i32
  }
  func.func @transform_8(%arg0: i32) -> (i32, i32) {
    %c0_i32 = arith.constant 0 : i32
    %c0_i32_0 = arith.constant 0 : i32
    %c0_i32_1 = arith.constant 0 : i32
    return %c0_i32, %c0_i32_0 : i32, i32
  }
  func.func @transform_9(%arg0: i32) -> (i32, i32) {
    %c0_i32 = arith.constant 0 : i32
    %c0_i32_0 = arith.constant 0 : i32
    return %arg0, %c0_i32 : i32, i32
  }
  func.func @transform_10(%arg0: i32) -> (i32, i32) {
    %c0_i32 = arith.constant 0 : i32
    %c0_i32_0 = arith.constant 0 : i32
    return %arg0, %c0_i32 : i32, i32
  }
}

</mosaic_0001>

<llo_original>
// kernel: autoencoder_forward.1
$region0: #{autoencoder_forward.1}
  #allocation0 [shape = 'u32[]', space=smem, size = 0x4, offset = 0x4, fixed_abs, tag = 'smem constant byte address 0x4 - core index']
  #allocation1 [shape = 'u32[144,128]{1,0:T(1,128)}', space=vmem, size = 0x12000, scoped, tag = 'internal scratch']
  %s0 = inlined_call_operand.vmem [shape: bf16[8,128], index: 0, kind: input, shape index: {}]
  %s1 = inlined_call_operand.vmem [shape: bf16[128,128], index: 1, kind: input, shape index: {}]
  %s2 = inlined_call_operand.vmem [shape: f32[1,128], index: 2, kind: input, shape index: {}]
  %s3 = inlined_call_operand.vmem [shape: bf16[128,128], index: 3, kind: input, shape index: {}]
  %s4 = inlined_call_operand.vmem [shape: f32[1,128], index: 4, kind: input, shape index: {}]
  %s5 = inlined_call_operand.vmem [shape: bf16[128,128], index: 5, kind: input, shape index: {}]
  %s6 = inlined_call_operand.vmem [shape: f32[1,128], index: 6, kind: input, shape index: {}]
  %s7 = inlined_call_operand.vmem [shape: bf16[128,128], index: 7, kind: input, shape index: {}]
  %s8 = inlined_call_operand.vmem [shape: f32[1,128], index: 8, kind: input, shape index: {}]
  %s9 = inlined_call_operand.hbm [shape: f32[8,128], index: 9, kind: output, shape index: {0}]
  %s10 = inlined_call_operand.hbm [shape: f32[8,128], index: 10, kind: output, shape index: {1}]
  %11 = xla_tuple %s9, %s10
  %s12 = sld [smem:[#allocation0]]
  $region54: #{autoencoder_forward.1} parent=0
    _
  %s14 = ssub.s32 1, %s12
  %s15 = scalar_select 0, %s14, %s12
  $region1: #{autoencoder_forward.1} parent=0
    #allocation2 [shape = 'u8[4096]{0}', space=vmem, size = 0x1000, scoped, tag = 'output window, operand 0, single buffered']
    #allocation3 [shape = 's32[1]{0}', space=sflag, size = 0x4, scoped, tag = 'scoped memory for autoencoder_forward.1']
    #allocation4 [shape = 'u8[4096]{0}', space=vmem, size = 0x1000, scoped, tag = 'output window, operand 1, single buffered']
    #allocation5 [shape = 's32[1]{0}', space=sflag, size = 0x4, scoped, tag = 'scoped memory for autoencoder_forward.1']
    %16 = vsyncpa [#allocation3], 0
    %17 = vsyncpa [#allocation5], 0
    // Predicated region
    $region2: #{autoencoder_forward.1} parent=1 // pred_check
      _
    $region3: #{autoencoder_forward.1} parent=1 // pred_check_branch
      %19 = sbr.rel (0) target = $region5
    $region4: #{autoencoder_forward.1} parent=1 // pred_region
      _
    $region5: #{autoencoder_forward.1} parent=1 // pred_fallthru
      _
    // Predicated region
    $region6: #{autoencoder_forward.1} parent=1 // pred_check
      _
    $region7: #{autoencoder_forward.1} parent=1 // pred_check_branch
      %21 = sbr.rel (0) target = $region9
    $region8: #{autoencoder_forward.1} parent=1 // pred_region
      _
    $region9: #{autoencoder_forward.1} parent=1 // pred_fallthru
      _
    // Predicated region
    $region10: #{autoencoder_forward.1} parent=1 // pred_check
      _
    $region11: #{autoencoder_forward.1} parent=1 // pred_check_branch
      %23 = sbr.rel (0) target = $region13
    $region12: #{autoencoder_forward.1} parent=1 // pred_region
      _
    $region13: #{autoencoder_forward.1} parent=1 // pred_fallthru
      _
    // Predicated region
    $region14: #{autoencoder_forward.1} parent=1 // pred_check
      _
    $region15: #{autoencoder_forward.1} parent=1 // pred_check_branch
      %25 = sbr.rel (0) target = $region17
    $region16: #{autoencoder_forward.1} parent=1 // pred_region
      _
    $region17: #{autoencoder_forward.1} parent=1 // pred_fallthru
      _
    // Predicated region
    $region18: #{autoencoder_forward.1} parent=1 // pred_check
      _
    $region19: #{autoencoder_forward.1} parent=1 // pred_check_branch
      %27 = sbr.rel (0) target = $region21
    $region20: #{autoencoder_forward.1} parent=1 // pred_region
      _
    $region21: #{autoencoder_forward.1} parent=1 // pred_fallthru
      _
    // Predicated region
    $region22: #{autoencoder_forward.1} parent=1 // pred_check
      _
    $region23: #{autoencoder_forward.1} parent=1 // pred_check_branch
      %29 = sbr.rel (0) target = $region25
    $region24: #{autoencoder_forward.1} parent=1 // pred_region
      _
    $region25: #{autoencoder_forward.1} parent=1 // pred_fallthru
      _
    // Predicated region
    $region26: #{autoencoder_forward.1} parent=1 // pred_check
      _
    $region27: #{autoencoder_forward.1} parent=1 // pred_check_branch
      %31 = sbr.rel (0) target = $region29
    $region28: #{autoencoder_forward.1} parent=1 // pred_region
      _
    $region29: #{autoencoder_forward.1} parent=1 // pred_fallthru
      _
    // Predicated region
    $region30: #{autoencoder_forward.1} parent=1 // pred_check
      _
    $region31: #{autoencoder_forward.1} parent=1 // pred_check_branch
      %33 = sbr.rel (0) target = $region33
    $region32: #{autoencoder_forward.1} parent=1 // pred_region
      _
    $region33: #{autoencoder_forward.1} parent=1 // pred_fallthru
      _
    // Predicated region
    $region34: #{autoencoder_forward.1} parent=1 // pred_check
      _
    $region35: #{autoencoder_forward.1} parent=1 // pred_check_branch
      %35 = sbr.rel (0) target = $region37
    $region36: #{autoencoder_forward.1} parent=1 // pred_region
      _
    $region37: #{autoencoder_forward.1} parent=1 // pred_fallthru
      _
    %v37 = vld [vmem:[%s0] sm:$0xf]
    %v38 = vld [vmem:[%s1] sm:$0xf]
    %v39 = vld [vmem:[%s1 + $0x4] sm:$0xf]
    %v40 = vld [vmem:[%s1 + $0x8] sm:$0xf]
    %v41 = vld [vmem:[%s1 + $0xc] sm:$0xf]
    %v42 = vld [vmem:[%s1 + $0x10] sm:$0xf]
    %v43 = vld [vmem:[%s1 + $0x14] sm:$0xf]
    %v44 = vld [vmem:[%s1 + $0x18] sm:$0xf]
    %v45 = vld [vmem:[%s1 + $0x1c] sm:$0xf]
    %v46 = vld [vmem:[%s1 + $0x20] sm:$0xf]
    %v47 = vld [vmem:[%s1 + $0x24] sm:$0xf]
    %v48 = vld [vmem:[%s1 + $0x28] sm:$0xf]
    %v49 = vld [vmem:[%s1 + $0x2c] sm:$0xf]
    %v50 = vld [vmem:[%s1 + $0x30] sm:$0xf]
    %v51 = vld [vmem:[%s1 + $0x34] sm:$0xf]
    %v52 = vld [vmem:[%s1 + $0x38] sm:$0xf]
    %v53 = vld [vmem:[%s1 + $0x3c] sm:$0xf]
    %v54 = vld [vmem:[%s2] sm:$0x1]
    %v56 = vlaneseq
    %v57 = vshrl.u32 %v56, 7
    %v58 = vsub.s32 0, %v57
    %v59 = vrot.slane %v54, %v58
    %v77 = vunpack.c.l.b16 %v38
    %v78 = vunpack.c.l.b16 %v39
    %v79 = vunpack.c.l.b16 %v40
    %v80 = vunpack.c.l.b16 %v41
    %v81 = vunpack.c.l.b16 %v42
    %v82 = vunpack.c.l.b16 %v43
    %v83 = vunpack.c.l.b16 %v44
    %v84 = vunpack.c.l.b16 %v45
    %v85 = vunpack.c.l.b16 %v46
    %v86 = vunpack.c.l.b16 %v47
    %v87 = vunpack.c.l.b16 %v48
    %v88 = vunpack.c.l.b16 %v49
    %v89 = vunpack.c.l.b16 %v50
    %v90 = vunpack.c.l.b16 %v51
    %v91 = vunpack.c.l.b16 %v52
    %v92 = vunpack.c.l.b16 %v53
    %v93 = vpack.c.b16 %v78, %v77
    %v94 = vpack.c.b16 %v80, %v79
    %v95 = vpack.c.b16 %v82, %v81
    %v96 = vpack.c.b16 %v84, %v83
    %v97 = vpack.c.b16 %v86, %v85
    %v98 = vpack.c.b16 %v88, %v87
    %v99 = vpack.c.b16 %v90, %v89
    %v100 = vpack.c.b16 %v92, %v91
    %109 = vmatprep.subr.bf16.mxu0 0
    %110 = vmatpush1.bf16.msra.mxu0 %v93
    %111 = vmatprep.subr.bf16.mxu0 0
    %112 = vmatpush1.bf16.msra.mxu0 %v94
    %113 = vmatprep.subr.bf16.mxu0 0
    %114 = vmatpush1.bf16.msra.mxu0 %v95
    %115 = vmatprep.subr.bf16.mxu0 0
    %116 = vmatpush1.bf16.msra.mxu0 %v96
    %117 = vmatprep.subr.bf16.mxu0 0
    %118 = vmatpush1.bf16.msra.mxu0 %v97
    %119 = vmatprep.subr.bf16.mxu0 0
    %120 = vmatpush1.bf16.msra.mxu0 %v98
    %121 = vmatprep.subr.bf16.mxu0 0
    %122 = vmatpush1.bf16.msra.mxu0 %v99
    %123 = vmatprep.subr.bf16.mxu0 0
    %124 = vmatpush1.bf16.msra.mxu0 %v100
    %125 = vmatprep.subr.bf16.mxu0 0
    %126 = vmatpush1.bf16.msra.mxu0 0
    %127 = vmatprep.subr.bf16.mxu0 0
    %128 = vmatpush1.bf16.msra.mxu0 0
    %129 = vmatprep.subr.bf16.mxu0 0
    %130 = vmatpush1.bf16.msra.mxu0 0
    %131 = vmatprep.subr.bf16.mxu0 0
    %132 = vmatpush1.bf16.msra.mxu0 0
    %133 = vmatprep.subr.bf16.mxu0 0
    %134 = vmatpush1.bf16.msra.mxu0 0
    %135 = vmatprep.subr.bf16.mxu0 0
    %136 = vmatpush1.bf16.msra.mxu0 0
    %137 = vmatprep.subr.bf16.mxu0 0
    %138 = vmatpush1.bf16.msra.mxu0 0
    %139 = vmatprep.subr.bf16.mxu0 0
    %140 = vmatpush1.bf16.msra.mxu0 0
    %141 = vmatprep.mubr.bf16.mxu0 0
    %142 = vmatmul.mubr.bf16.gmra.mrb[0].mxu0 %v37
    %v143 = vpop.f32.mrb[0].mxu0
    %v144 = vadd.f32 %v59, %v143
    %v145 = vpop.f32.mrb[0].mxu0
    %v146 = vpop.f32.mrb[0].mxu0
    %v147 = vpop.f32.mrb[0].mxu0
    %148 = vdwg.mxu0
    %v149 = vmax.f32 %v144, 0.0
    %v150 = vpack.c.bf16 %v149, %v149
    %v151 = vld [vmem:[%s3] sm:$0xf]
    %v152 = vld [vmem:[%s3 + $0x4] sm:$0xf]
    %v153 = vld [vmem:[%s3 + $0x8] sm:$0xf]
    %v154 = vld [vmem:[%s3 + $0xc] sm:$0xf]
    %v155 = vld [vmem:[%s3 + $0x10] sm:$0xf]
    %v156 = vld [vmem:[%s3 + $0x14] sm:$0xf]
    %v157 = vld [vmem:[%s3 + $0x18] sm:$0xf]
    %v158 = vld [vmem:[%s3 + $0x1c] sm:$0xf]
    %v159 = vld [vmem:[%s3 + $0x20] sm:$0xf]
    %v160 = vld [vmem:[%s3 + $0x24] sm:$0xf]
    %v161 = vld [vmem:[%s3 + $0x28] sm:$0xf]
    %v162 = vld [vmem:[%s3 + $0x2c] sm:$0xf]
    %v163 = vld [vmem:[%s3 + $0x30] sm:$0xf]
    %v164 = vld [vmem:[%s3 + $0x34] sm:$0xf]
    %v165 = vld [vmem:[%s3 + $0x38] sm:$0xf]
    %v166 = vld [vmem:[%s3 + $0x3c] sm:$0xf]
    %v167 = vld [vmem:[%s4] sm:$0x1]
    %v169 = vlaneseq
    %v170 = vshrl.u32 %v169, 7
    %v171 = vsub.s32 0, %v170
    %v172 = vrot.slane %v167, %v171
    %v190 = vunpack.c.l.b16 %v151
    %v191 = vunpack.c.l.b16 %v152
    %v192 = vunpack.c.l.b16 %v153
    %v193 = vunpack.c.l.b16 %v154
    %v194 = vunpack.c.l.b16 %v155
    %v195 = vunpack.c.l.b16 %v156
    %v196 = vunpack.c.l.b16 %v157
    %v197 = vunpack.c.l.b16 %v158
    %v198 = vunpack.c.l.b16 %v159
    %v199 = vunpack.c.l.b16 %v160
    %v200 = vunpack.c.l.b16 %v161
    %v201 = vunpack.c.l.b16 %v162
    %v202 = vunpack.c.l.b16 %v163
    %v203 = vunpack.c.l.b16 %v164
    %v204 = vunpack.c.l.b16 %v165
    %v205 = vunpack.c.l.b16 %v166
    %v206 = vpack.c.b16 %v191, %v190
    %v207 = vpack.c.b16 %v193, %v192
    %v208 = vpack.c.b16 %v195, %v194
    %v209 = vpack.c.b16 %v197, %v196
    %v210 = vpack.c.b16 %v199, %v198
    %v211 = vpack.c.b16 %v201, %v200
    %v212 = vpack.c.b16 %v203, %v202
    %v213 = vpack.c.b16 %v205, %v204
    %222 = vmatprep.subr.bf16.mxu0 0
    %223 = vmatpush1.bf16.msra.mxu0 %v206
    %224 = vmatprep.subr.bf16.mxu0 0
    %225 = vmatpush1.bf16.msra.mxu0 %v207
    %226 = vmatprep.subr.bf16.mxu0 0
    %227 = vmatpush1.bf16.msra.mxu0 %v208
    %228 = vmatprep.subr.bf16.mxu0 0
    %229 = vmatpush1.bf16.msra.mxu0 %v209
    %230 = vmatprep.subr.bf16.mxu0 0
    %231 = vmatpush1.bf16.msra.mxu0 %v210
    %232 = vmatprep.subr.bf16.mxu0 0
    %233 = vmatpush1.bf16.msra.mxu0 %v211
    %234 = vmatprep.subr.bf16.mxu0 0
    %235 = vmatpush1.bf16.msra.mxu0 %v212
    %236 = vmatprep.subr.bf16.mxu0 0
    %237 = vmatpush1.bf16.msra.mxu0 %v213
    %238 = vmatprep.subr.bf16.mxu0 0
    %239 = vmatpush1.bf16.msra.mxu0 0
    %240 = vmatprep.subr.bf16.mxu0 0
    %241 = vmatpush1.bf16.msra.mxu0 0
    %242 = vmatprep.subr.bf16.mxu0 0
    %243 = vmatpush1.bf16.msra.mxu0 0
    %244 = vmatprep.subr.bf16.mxu0 0
    %245 = vmatpush1.bf16.msra.mxu0 0
    %246 = vmatprep.subr.bf16.mxu0 0
    %247 = vmatpush1.bf16.msra.mxu0 0
    %248 = vmatprep.subr.bf16.mxu0 0
    %249 = vmatpush1.bf16.msra.mxu0 0
    %250 = vmatprep.subr.bf16.mxu0 0
    %251 = vmatpush1.bf16.msra.mxu0 0
    %252 = vmatprep.subr.bf16.mxu0 0
    %253 = vmatpush1.bf16.msra.mxu0 0
    %254 = vmatprep.mubr.bf16.mxu0 0
    %255 = vmatmul.mubr.bf16.gmra.mrb[0].mxu0 %v150
    %v256 = vpop.f32.mrb[0].mxu0
    %v257 = vadd.f32 %v172, %v256
    %v258 = vpop.f32.mrb[0].mxu0
    %v259 = vpop.f32.mrb[0].mxu0
    %v260 = vpop.f32.mrb[0].mxu0
    %261 = vdwg.mxu0
    %v262 = vmax.f32 %v257, 0.0
    %v263 = vsub.f32 0.0, %v262
    %v264 = vmul.f32 %v263, 1.442695
    %v265 = vpow.pop %v264
    %v266 = vadd.f32 %v265, 1.0
    %v267 = vrcp.pop %v266
    %268 = vst [vmem:[#allocation2] sm:$0xff] %v267
    %v269 = vpack.c.bf16 %v267, %v267
    %v270 = vld [vmem:[%s5] sm:$0xf]
    %v271 = vld [vmem:[%s5 + $0x4] sm:$0xf]
    %v272 = vld [vmem:[%s5 + $0x8] sm:$0xf]
    %v273 = vld [vmem:[%s5 + $0xc] sm:$0xf]
    %v274 = vld [vmem:[%s5 + $0x10] sm:$0xf]
    %v275 = vld [vmem:[%s5 + $0x14] sm:$0xf]
    %v276 = vld [vmem:[%s5 + $0x18] sm:$0xf]
    %v277 = vld [vmem:[%s5 + $0x1c] sm:$0xf]
    %v278 = vld [vmem:[%s5 + $0x20] sm:$0xf]
    %v279 = vld [vmem:[%s5 + $0x24] sm:$0xf]
    %v280 = vld [vmem:[%s5 + $0x28] sm:$0xf]
    %v281 = vld [vmem:[%s5 + $0x2c] sm:$0xf]
    %v282 = vld [vmem:[%s5 + $0x30] sm:$0xf]
    %v283 = vld [vmem:[%s5 + $0x34] sm:$0xf]
    %v284 = vld [vmem:[%s5 + $0x38] sm:$0xf]
    %v285 = vld [vmem:[%s5 + $0x3c] sm:$0xf]
    %v286 = vld [vmem:[%s6] sm:$0x1]
    %v288 = vlaneseq
    %v289 = vshrl.u32 %v288, 7
    %v290 = vsub.s32 0, %v289
    %v291 = vrot.slane %v286, %v290
    %v309 = vunpack.c.l.b16 %v270
    %v310 = vunpack.c.l.b16 %v271
    %v311 = vunpack.c.l.b16 %v272
    %v312 = vunpack.c.l.b16 %v273
    %v313 = vunpack.c.l.b16 %v274
    %v314 = vunpack.c.l.b16 %v275
    %v315 = vunpack.c.l.b16 %v276
    %v316 = vunpack.c.l.b16 %v277
    %v317 = vunpack.c.l.b16 %v278
    %v318 = vunpack.c.l.b16 %v279
    %v319 = vunpack.c.l.b16 %v280
    %v320 = vunpack.c.l.b16 %v281
    %v321 = vunpack.c.l.b16 %v282
    %v322 = vunpack.c.l.b16 %v283
    %v323 = vunpack.c.l.b16 %v284
    %v324 = vunpack.c.l.b16 %v285
    %v325 = vpack.c.b16 %v310, %v309
    %v326 = vpack.c.b16 %v312, %v311
    %v327 = vpack.c.b16 %v314, %v313
    %v328 = vpack.c.b16 %v316, %v315
    %v329 = vpack.c.b16 %v318, %v317
    %v330 = vpack.c.b16 %v320, %v319
    %v331 = vpack.c.b16 %v322, %v321
    %v332 = vpack.c.b16 %v324, %v323
    %341 = vmatprep.subr.bf16.mxu0 0
    %342 = vmatpush1.bf16.msra.mxu0 %v325
    %343 = vmatprep.subr.bf16.mxu0 0
    %344 = vmatpush1.bf16.msra.mxu0 %v326
    %345 = vmatprep.subr.bf16.mxu0 0
    %346 = vmatpush1.bf16.msra.mxu0 %v327
    %347 = vmatprep.subr.bf16.mxu0 0
    %348 = vmatpush1.bf16.msra.mxu0 %v328
    %349 = vmatprep.subr.bf16.mxu0 0
    %350 = vmatpush1.bf16.msra.mxu0 %v329
    %351 = vmatprep.subr.bf16.mxu0 0
    %352 = vmatpush1.bf16.msra.mxu0 %v330
    %353 = vmatprep.subr.bf16.mxu0 0
    %354 = vmatpush1.bf16.msra.mxu0 %v331
    %355 = vmatprep.subr.bf16.mxu0 0
    %356 = vmatpush1.bf16.msra.mxu0 %v332
    %357 = vmatprep.subr.bf16.mxu0 0
    %358 = vmatpush1.bf16.msra.mxu0 0
    %359 = vmatprep.subr.bf16.mxu0 0
    %360 = vmatpush1.bf16.msra.mxu0 0
    %361 = vmatprep.subr.bf16.mxu0 0
    %362 = vmatpush1.bf16.msra.mxu0 0
    %363 = vmatprep.subr.bf16.mxu0 0
    %364 = vmatpush1.bf16.msra.mxu0 0
    %365 = vmatprep.subr.bf16.mxu0 0
    %366 = vmatpush1.bf16.msra.mxu0 0
    %367 = vmatprep.subr.bf16.mxu0 0
    %368 = vmatpush1.bf16.msra.mxu0 0
    %369 = vmatprep.subr.bf16.mxu0 0
    %370 = vmatpush1.bf16.msra.mxu0 0
    %371 = vmatprep.subr.bf16.mxu0 0
    %372 = vmatpush1.bf16.msra.mxu0 0
    %373 = vmatprep.mubr.bf16.mxu0 0
    %374 = vmatmul.mubr.bf16.gmra.mrb[0].mxu0 %v269
    %v375 = vpop.f32.mrb[0].mxu0
    %v376 = vadd.f32 %v291, %v375
    %v377 = vpop.f32.mrb[0].mxu0
    %v378 = vpop.f32.mrb[0].mxu0
    %v379 = vpop.f32.mrb[0].mxu0
    %380 = vdwg.mxu0
    %v381 = vmax.f32 %v376, 0.0
    %v382 = vpack.c.bf16 %v381, %v381
    %v383 = vld [vmem:[%s7] sm:$0xf]
    %v384 = vld [vmem:[%s7 + $0x4] sm:$0xf]
    %v385 = vld [vmem:[%s7 + $0x8] sm:$0xf]
    %v386 = vld [vmem:[%s7 + $0xc] sm:$0xf]
    %v387 = vld [vmem:[%s7 + $0x10] sm:$0xf]
    %v388 = vld [vmem:[%s7 + $0x14] sm:$0xf]
    %v389 = vld [vmem:[%s7 + $0x18] sm:$0xf]
    %v390 = vld [vmem:[%s7 + $0x1c] sm:$0xf]
    %v391 = vld [vmem:[%s7 + $0x20] sm:$0xf]
    %v392 = vld [vmem:[%s7 + $0x24] sm:$0xf]
    %v393 = vld [vmem:[%s7 + $0x28] sm:$0xf]
    %v394 = vld [vmem:[%s7 + $0x2c] sm:$0xf]
    %v395 = vld [vmem:[%s7 + $0x30] sm:$0xf]
    %v396 = vld [vmem:[%s7 + $0x34] sm:$0xf]
    %v397 = vld [vmem:[%s7 + $0x38] sm:$0xf]
    %v398 = vld [vmem:[%s7 + $0x3c] sm:$0xf]
    %v399 = vld [vmem:[%s8] sm:$0x1]
    %v401 = vlaneseq
    %v402 = vshrl.u32 %v401, 7
    %v403 = vsub.s32 0, %v402
    %v404 = vrot.slane %v399, %v403
    %v422 = vunpack.c.l.b16 %v383
    %v423 = vunpack.c.l.b16 %v384
    %v424 = vunpack.c.l.b16 %v385
    %v425 = vunpack.c.l.b16 %v386
    %v426 = vunpack.c.l.b16 %v387
    %v427 = vunpack.c.l.b16 %v388
    %v428 = vunpack.c.l.b16 %v389
    %v429 = vunpack.c.l.b16 %v390
    %v430 = vunpack.c.l.b16 %v391
    %v431 = vunpack.c.l.b16 %v392
    %v432 = vunpack.c.l.b16 %v393
    %v433 = vunpack.c.l.b16 %v394
    %v434 = vunpack.c.l.b16 %v395
    %v435 = vunpack.c.l.b16 %v396
    %v436 = vunpack.c.l.b16 %v397
    %v437 = vunpack.c.l.b16 %v398
    %v438 = vpack.c.b16 %v423, %v422
    %v439 = vpack.c.b16 %v425, %v424
    %v440 = vpack.c.b16 %v427, %v426
    %v441 = vpack.c.b16 %v429, %v428
    %v442 = vpack.c.b16 %v431, %v430
    %v443 = vpack.c.b16 %v433, %v432
    %v444 = vpack.c.b16 %v435, %v434
    %v445 = vpack.c.b16 %v437, %v436
    %454 = vmatprep.subr.bf16.mxu0 0
    %455 = vmatpush1.bf16.msra.mxu0 %v438
    %456 = vmatprep.subr.bf16.mxu0 0
    %457 = vmatpush1.bf16.msra.mxu0 %v439
    %458 = vmatprep.subr.bf16.mxu0 0
    %459 = vmatpush1.bf16.msra.mxu0 %v440
    %460 = vmatprep.subr.bf16.mxu0 0
    %461 = vmatpush1.bf16.msra.mxu0 %v441
    %462 = vmatprep.subr.bf16.mxu0 0
    %463 = vmatpush1.bf16.msra.mxu0 %v442
    %464 = vmatprep.subr.bf16.mxu0 0
    %465 = vmatpush1.bf16.msra.mxu0 %v443
    %466 = vmatprep.subr.bf16.mxu0 0
    %467 = vmatpush1.bf16.msra.mxu0 %v444
    %468 = vmatprep.subr.bf16.mxu0 0
    %469 = vmatpush1.bf16.msra.mxu0 %v445
    %470 = vmatprep.subr.bf16.mxu0 0
    %471 = vmatpush1.bf16.msra.mxu0 0
    %472 = vmatprep.subr.bf16.mxu0 0
    %473 = vmatpush1.bf16.msra.mxu0 0
    %474 = vmatprep.subr.bf16.mxu0 0
    %475 = vmatpush1.bf16.msra.mxu0 0
    %476 = vmatprep.subr.bf16.mxu0 0
    %477 = vmatpush1.bf16.msra.mxu0 0
    %478 = vmatprep.subr.bf16.mxu0 0
    %479 = vmatpush1.bf16.msra.mxu0 0
    %480 = vmatprep.subr.bf16.mxu0 0
    %481 = vmatpush1.bf16.msra.mxu0 0
    %482 = vmatprep.subr.bf16.mxu0 0
    %483 = vmatpush1.bf16.msra.mxu0 0
    %484 = vmatprep.subr.bf16.mxu0 0
    %485 = vmatpush1.bf16.msra.mxu0 0
    %486 = vmatprep.mubr.bf16.mxu0 0
    %487 = vmatmul.mubr.bf16.gmra.mrb[0].mxu0 %v382
    %v488 = vpop.f32.mrb[0].mxu0
    %v489 = vadd.f32 %v404, %v488
    %v490 = vpop.f32.mrb[0].mxu0
    %v491 = vpop.f32.mrb[0].mxu0
    %v492 = vpop.f32.mrb[0].mxu0
    %493 = vdwg.mxu0
    %v494 = vsub.f32 0.0, %v489
    %v495 = vmul.f32 %v494, 1.442695
    %v496 = vpow.pop %v495
    %v497 = vadd.f32 %v496, 1.0
    %v498 = vrcp.pop %v497
    %499 = vst [vmem:[#allocation4] sm:$0xff] %v498
    // Predicated region
    $region38: #{autoencoder_forward.1} parent=1 // pred_check
      _
    $region39: #{autoencoder_forward.1} parent=1 // pred_check_branch
      %501 = sbr.rel (0) target = $region41
    $region40: #{autoencoder_forward.1} parent=1 // pred_region
      %s503 = ssub.s32 128, 128
      %504 = vsyncadd [#allocation3], %s503
      %s506 = sshll.u32 [#allocation2], 4
      %s507 = int_to_ptr.vmem [resolvable:$true] %s506
      %509 = dma.vmem_to_hbm [thread:$0]  %s507, 128, %s9, [#allocation3]
    $region41: #{autoencoder_forward.1} parent=1 // pred_fallthru
      _
    // Predicated region
    $region42: #{autoencoder_forward.1} parent=1 // pred_check
      _
    $region43: #{autoencoder_forward.1} parent=1 // pred_check_branch
      %511 = sbr.rel (0) target = $region45
    $region44: #{autoencoder_forward.1} parent=1 // pred_region
      %s513 = ssub.s32 128, 128
      %514 = vsyncadd [#allocation5], %s513
      %s516 = sshll.u32 [#allocation4], 4
      %s517 = int_to_ptr.vmem [resolvable:$true] %s516
      %519 = dma.vmem_to_hbm [thread:$0]  %s517, 128, %s10, [#allocation5]
    $region45: #{autoencoder_forward.1} parent=1 // pred_fallthru
      _
    // Predicated region
    $region46: #{autoencoder_forward.1} parent=1 // pred_check
      _
    $region47: #{autoencoder_forward.1} parent=1 // pred_check_branch
      %521 = sbr.rel (0) target = $region49
    $region48: #{autoencoder_forward.1} parent=1 // pred_region
      %522 = dma.done [#allocation3], 128
    $region49: #{autoencoder_forward.1} parent=1 // pred_fallthru
      _
    // Predicated region
    $region50: #{autoencoder_forward.1} parent=1 // pred_check
      _
    $region51: #{autoencoder_forward.1} parent=1 // pred_check_branch
      %524 = sbr.rel (0) target = $region53
    $region52: #{autoencoder_forward.1} parent=1 // pred_region
      %525 = dma.done [#allocation5], 128
    $region53: #{autoencoder_forward.1} parent=1 // pred_fallthru
      _
    %526 = vsyncpa [#allocation3], 1
    %527 = vsyncpa [#allocation5], 1

</llo_original>
